<compile_context>
chip_gen: v7x
topology: tpu7x:2x2x1
jax: 0.10.0
libtpu: 0.0.40
codegen_flags: <defaults>
</compile_context>

<pallas_src>
import functools

import jax
import jax.numpy as jnp
from jax import lax
from jax.experimental import pallas as pl
from jax.experimental.pallas import tpu as pltpu

LANES = 128
SUBLANES = 8


def _masked_l1_kernel(pred_ref, tgt_ref, sum_ref, cnt_ref, *,
                      rows, tile_rows, tiles_per_core, tiles_total):
    c = pl.program_id(0)
    i = pl.program_id(1)

    @pl.when(i == 0)
    def _():
        sum_ref[...] = jnp.zeros_like(sum_ref)
        cnt_ref[...] = jnp.zeros_like(cnt_ref)

    t = tgt_ref[...].astype(jnp.float32)
    p = pred_ref[...].astype(jnp.float32)
    absdiff = jnp.abs(t - p)

    nfold = tile_rows // SUBLANES

    def accumulate(valid):
        # Select before accumulating so NaN/Inf (masked positions, or stale
        # data in the out-of-bounds part of a partial tile) never propagate.
        vals = jnp.where(valid, absdiff, 0.0)
        ones = jnp.where(valid, 1.0, 0.0)
        # Sublane-fold the tile to (8,128) with pure VPU adds; no per-step
        # cross-lane (XLU) reduction, no (1,1) read-modify-write per step.
        sum_ref[...] += vals.reshape(nfold, SUBLANES, LANES).sum(axis=0)[None]
        cnt_ref[...] += ones.reshape(nfold, SUBLANES, LANES).sum(axis=0)[None]

    logical_blk = c * tiles_per_core + i
    is_boundary = logical_blk >= tiles_total - 1

    # Interior tiles: the cheap mask only (no iota / row-range compare).
    @pl.when(jnp.logical_not(is_boundary))
    def _():
        accumulate(t > 0.0)

    # Boundary tiles: partial last tile and any clamped out-of-range steps of
    # the second core get the full row-range mask so nothing is double
    # counted and stale/out-of-bounds data contributes exactly zero.
    @pl.when(is_boundary)
    def _():
        row_ids = logical_blk * tile_rows + lax.broadcasted_iota(
            jnp.int32, (tile_rows, LANES), 0)
        accumulate((t > 0.0) & (row_ids < rows))


def _tpu_kind():
    try:
        return jax.devices()[0].device_kind.lower()
    except Exception:
        return ""


def masked_l1_loss(pred, target, *, tile_rows=None):
    assert pred.ndim == target.ndim, "inconsistent dimensions"
    assert pred.shape == target.shape

    kind = _tpu_kind()
    if tile_rows is None:
        # v7x (~3.2 TB/s HBM per TC) needs bigger steps to amortize the
        # per-step overhead; 4096 fits comfortably everywhere else.
        tile_rows = 8192 if "v7" in kind else 4096

    n = pred.size
    flat_p = pred.reshape(-1)
    flat_t = target.reshape(-1)

    rows = n // LANES

    # Second-minor tiling multiple required by the narrowest streamed dtype:
    # 8 for 32-bit, 16 for 16-bit, 32 for 8-bit inputs.
    sub_mult = 8
    for d in (pred.dtype, target.dtype):
        isz = jnp.dtype(d).itemsize
        sub_mult = max(sub_mult, 8 * max(1, 4 // isz))

    s_k = jnp.float32(0.0)
    c_k = jnp.float32(0.0)
    n_bulk = 0

    if rows >= sub_mult:
        n_bulk = rows * LANES

        if n_bulk == n:
            # Same element count -> free reshape, no wrapper-side copy.
            p2d = flat_p.reshape(rows, LANES)
            t2d = flat_t.reshape(rows, LANES)
        else:
            # Non-128-aligned element count: the prefix slice materializes a
            # copy before the custom call (one extra HBM pass).
            # TODO(synk): push the ragged tail into the kernel via a manual
            # HBM DMA (memory_space=pl.ANY) so non-aligned inputs stream
            # directly from their original buffer.
            p2d = flat_p[:n_bulk].reshape(rows, LANES)
            t2d = flat_t[:n_bulk].reshape(rows, LANES)

        # Tile rows: clamp to the array, round to the dtype sublane multiple.
        tr = min(max(tile_rows, sub_mult), rows)
        tr = (tr // sub_mult) * sub_mult

        tiles_total = pl.cdiv(rows, tr)

        # Split across the two TensorCores only where it can help (v7x) and
        # only when there is more than one tile to split.
        num_cores = 2 if ("v7" in kind and tiles_total >= 2) else 1
        tiles_per_core = pl.cdiv(tiles_total, num_cores)

        def in_map(c, i):
            # Clamp so the pipeline never issues a fully out-of-bounds DMA;
            # such steps fall in the kernel's boundary branch and contribute
            # exactly zero via the row-range mask.
            return (jnp.minimum(c * tiles_per_core + i, tiles_total - 1), 0)

        itemsize = (jnp.dtype(pred.dtype).itemsize
                    + jnp.dtype(target.dtype).itemsize)

        kernel = functools.partial(
            _masked_l1_kernel, rows=rows, tile_rows=tr,
            tiles_per_core=tiles_per_core, tiles_total=tiles_total)

        def run(dim_sems):
            return pl.pallas_call(
                kernel,
                out_shape=(
                    jax.ShapeDtypeStruct((num_cores, SUBLANES, LANES),
                                         jnp.float32),
                    jax.ShapeDtypeStruct((num_cores, SUBLANES, LANES),
                                         jnp.float32),
                ),
                grid_spec=pltpu.PrefetchScalarGridSpec(
                    num_scalar_prefetch=0,
                    grid=(num_cores, tiles_per_core),
                    in_specs=[pl.BlockSpec((tr, LANES), in_map),
                              pl.BlockSpec((tr, LANES), in_map)],
                    out_specs=[
                        pl.BlockSpec((1, SUBLANES, LANES),
                                     lambda c, i: (c, 0, 0)),
                        pl.BlockSpec((1, SUBLANES, LANES),
                                     lambda c, i: (c, 0, 0)),
                    ],
                ),
                compiler_params=pltpu.CompilerParams(
                    dimension_semantics=dim_sems,
                    vmem_limit_bytes=32 * 1024 * 1024),
                cost_estimate=pl.CostEstimate(
                    flops=4 * n_bulk, transcendentals=0,
                    bytes_accessed=n_bulk * itemsize),
            )(p2d, t2d)

        if num_cores > 1:
            try:
                # Actually engage both TensorCores on the leading axis.
                s_parts, c_parts = run((pltpu.CORE_PARALLEL, pltpu.ARBITRARY))
            except Exception:
                # Fallback if this chip/runtime rejects core_parallel.
                s_parts, c_parts = run(("parallel", "arbitrary"))
        else:
            s_parts, c_parts = run((pltpu.ARBITRARY, pltpu.ARBITRARY))

        s_k = jnp.sum(s_parts)
        c_k = jnp.sum(c_parts)

    # Ragged tail (< 128 elements, or the whole input when tiny) in plain JAX.
    t_tail = flat_t[n_bulk:].astype(jnp.float32)
    p_tail = flat_p[n_bulk:].astype(jnp.float32)
    tail_valid = t_tail > 0.0
    s_t = jnp.sum(jnp.where(tail_valid, jnp.abs(t_tail - p_tail), 0.0))
    c_t = jnp.sum(tail_valid.astype(jnp.float32))

    # Final divide is glue; 0/0 -> NaN matches torch's mean of an empty tensor.
    return ((s_k + s_t) / (c_k + c_t)).astype(jnp.float32)


def masked_l1_loss_ref(pred, target):
    t = target.astype(jnp.float32)
    p = pred.astype(jnp.float32)
    valid = t > 0.0
    return (jnp.sum(jnp.where(valid, jnp.abs(t - p), 0.0))
            / jnp.sum(valid.astype(jnp.float32)))


if __name__ == "__main__":
    key = jax.random.PRNGKey(0)
    k1, k2, k3, k4 = jax.random.split(key, 4)

    # NCHW inputs, like the PyTorch module would receive (128-aligned size ->
    # zero-copy path into the kernel).
    shape = (2, 4, 32, 32)
    pred = jax.random.normal(k1, shape, dtype=jnp.float32)
    # Target with a mix of positive (valid) and non-positive (masked) values.
    target = jax.random.normal(k2, shape, dtype=jnp.float32)

    ref = jax.block_until_ready(masked_l1_loss_ref(pred, target))

    # Default (large) tile.
    loss = jax.block_until_ready(masked_l1_loss(pred, target))
    assert jnp.allclose(loss, ref, rtol=1e-5, atol=1e-6), (loss, ref)

    # Small tile -> multi-step grid: exercises accumulator init/accumulate and
    # the boundary-vs-interior pl.when gating.
    loss2 = jax.block_until_ready(masked_l1_loss(pred, target, tile_rows=16))
    assert jnp.allclose(loss2, ref, rtol=1e-5, atol=1e-6), (loss2, ref)

    # Non-128-aligned element count -> kernel bulk + plain-JAX ragged tail,
    # with a partial (masked) last tile inside the kernel.
    shape3 = (2, 3, 15, 17)
    pred3 = jax.random.normal(k3, shape3, dtype=jnp.float32)
    target3 = jax.random.normal(k4, shape3, dtype=jnp.float32)
    loss3 = jax.block_until_ready(masked_l1_loss(pred3, target3, tile_rows=8))
    ref3 = jax.block_until_ready(masked_l1_loss_ref(pred3, target3))
    assert jnp.allclose(loss3, ref3, rtol=1e-5, atol=1e-6), (loss3, ref3)

    print("KERNEL_OK")
</pallas_src>

<mosaic_0001>
module attributes {stable_mosaic.version = 11 : i64} {
  func.func @_masked_l1_kernel(%arg0: i32, %arg1: i32, %arg2: memref<64x128xf32, #tpu.memory_space<vmem>>, %arg3: memref<64x128xf32, #tpu.memory_space<vmem>>, %arg4: memref<1x8x128xf32, #tpu.memory_space<vmem>>, %arg5: memref<1x8x128xf32, #tpu.memory_space<vmem>>) attributes {dimension_semantics = [#tpu.dimension_semantics<arbitrary>, #tpu.dimension_semantics<arbitrary>], iteration_bounds = array<i64: 1, 1>, scalar_prefetch = 0 : i64, scratch_operands = 0 : i64, tpu.core_type = #tpu.core_type<tc>, window_params = [{transform_indices = @transform_0, window_bounds = array<i64: 64, 128>}, {transform_indices = @transform_1, window_bounds = array<i64: 64, 128>}, {transform_indices = @transform_2, window_bounds = array<i64: 1, 8, 128>}, {transform_indices = @transform_3, window_bounds = array<i64: 1, 8, 128>}]} {
    %c0_i32 = arith.constant 0 : i32
    %0 = arith.cmpi eq, %arg1, %c0_i32 : i32
    %1 = arith.extui %0 : i1 to i32
    %c0_i32_0 = arith.constant 0 : i32
    %2 = arith.cmpi ne, %1, %c0_i32_0 : i32
    scf.if %2 {
      %cst = arith.constant 0.000000e+00 : f32
      %15 = vector.broadcast %cst : f32 to vector<1x8x128xf32>
      %c0_7 = arith.constant 0 : index
      %c0_8 = arith.constant 0 : index
      %c0_9 = arith.constant 0 : index
      %16 = vector.load %arg4[%c0_7, %c0_8, %c0_9] : memref<1x8x128xf32, #tpu.memory_space<vmem>>, vector<1x8x128xf32>
      tpu.vector_store %arg4[%c0_7, %c0_8, %c0_9], %15 {strides = array<i32>} : memref<1x8x128xf32, #tpu.memory_space<vmem>>, vector<1x8x128xf32>,
      %cst_10 = arith.constant 0.000000e+00 : f32
      %17 = vector.broadcast %cst_10 : f32 to vector<1x8x128xf32>
      %c0_11 = arith.constant 0 : index
      %c0_12 = arith.constant 0 : index
      %c0_13 = arith.constant 0 : index
      %18 = vector.load %arg5[%c0_11, %c0_12, %c0_13] : memref<1x8x128xf32, #tpu.memory_space<vmem>>, vector<1x8x128xf32>
      tpu.vector_store %arg5[%c0_11, %c0_12, %c0_13], %17 {strides = array<i32>} : memref<1x8x128xf32, #tpu.memory_space<vmem>>, vector<1x8x128xf32>,
    } else {
    }
    %c0 = arith.constant 0 : index
    %c0_1 = arith.constant 0 : index
    %3 = vector.load %arg3[%c0, %c0_1] : memref<64x128xf32, #tpu.memory_space<vmem>>, vector<64x128xf32>
    %c0_2 = arith.constant 0 : index
    %c0_3 = arith.constant 0 : index
    %4 = vector.load %arg2[%c0_2, %c0_3] : memref<64x128xf32, #tpu.memory_space<vmem>>, vector<64x128xf32>
    %5 = arith.subf %3, %4 : vector<64x128xf32>
    %6 = math.absf %5 : vector<64x128xf32>
    %c1_i32 = arith.constant 1 : i32
    %7 = arith.muli %arg0, %c1_i32 : i32
    %8 = arith.addi %7, %arg1 : i32
    %c0_i32_4 = arith.constant 0 : i32
    %9 = arith.cmpi sge, %8, %c0_i32_4 : i32
    %true = arith.constant true
    %10 = arith.xori %9, %true : i1
    %11 = arith.extui %10 : i1 to i32
    %c0_i32_5 = arith.constant 0 : i32
    %12 = arith.cmpi ne, %11, %c0_i32_5 : i32
    scf.if %12 {
      %cst = arith.constant 0.000000e+00 : f32
      %15 = vector.broadcast %cst : f32 to vector<64x128xf32>
      %16 = arith.cmpf ogt, %3, %15 : vector<64x128xf32>
      %cst_7 = arith.constant 0.000000e+00 : f32
      %17 = vector.broadcast %cst_7 : f32 to vector<64x128xf32>
      %18 = arith.select %16, %6, %17 : vector<64x128xi1>, vector<64x128xf32>
      %cst_8 = arith.constant 1.000000e+00 : f32
      %cst_9 = arith.constant 0.000000e+00 : f32
      %19 = vector.broadcast %cst_8 : f32 to vector<64x128xf32>
      %20 = vector.broadcast %cst_9 : f32 to vector<64x128xf32>
      %21 = arith.select %16, %19, %20 : vector<64x128xi1>, vector<64x128xf32>
      %c0_10 = arith.constant 0 : index
      %c0_11 = arith.constant 0 : index
      %c0_12 = arith.constant 0 : index
      %22 = vector.load %arg4[%c0_10, %c0_11, %c0_12] : memref<1x8x128xf32, #tpu.memory_space<vmem>>, vector<1x8x128xf32>
      %23 = vector.shape_cast %18 : vector<64x128xf32> to vector<8x8x128xf32>
      %cst_13 = arith.constant dense<0.000000e+00> : vector<8x128xf32>
      %24 = vector.multi_reduction <add>, %23, %cst_13 [0] : vector<8x8x128xf32> to vector<8x128xf32>
      %25 = vector.shape_cast %24 : vector<8x128xf32> to vector<1x8x128xf32>
      %26 = arith.addf %22, %25 : vector<1x8x128xf32>
      %c0_14 = arith.constant 0 : index
      %c0_15 = arith.constant 0 : index
      %c0_16 = arith.constant 0 : index
      %27 = vector.load %arg4[%c0_14, %c0_15, %c0_16] : memref<1x8x128xf32, #tpu.memory_space<vmem>>, vector<1x8x128xf32>
      tpu.vector_store %arg4[%c0_14, %c0_15, %c0_16], %26 {strides = array<i32>} : memref<1x8x128xf32, #tpu.memory_space<vmem>>, vector<1x8x128xf32>,
      %c0_17 = arith.constant 0 : index
      %c0_18 = arith.constant 0 : index
      %c0_19 = arith.constant 0 : index
      %28 = vector.load %arg5[%c0_17, %c0_18, %c0_19] : memref<1x8x128xf32, #tpu.memory_space<vmem>>, vector<1x8x128xf32>
      %29 = vector.shape_cast %21 : vector<64x128xf32> to vector<8x8x128xf32>
      %cst_20 = arith.constant dense<0.000000e+00> : vector<8x128xf32>
      %30 = vector.multi_reduction <add>, %29, %cst_20 [0] : vector<8x8x128xf32> to vector<8x128xf32>
      %31 = vector.shape_cast %30 : vector<8x128xf32> to vector<1x8x128xf32>
      %32 = arith.addf %28, %31 : vector<1x8x128xf32>
      %c0_21 = arith.constant 0 : index
      %c0_22 = arith.constant 0 : index
      %c0_23 = arith.constant 0 : index
      %33 = vector.load %arg5[%c0_21, %c0_22, %c0_23] : memref<1x8x128xf32, #tpu.memory_space<vmem>>, vector<1x8x128xf32>
      tpu.vector_store %arg5[%c0_21, %c0_22, %c0_23], %32 {strides = array<i32>} : memref<1x8x128xf32, #tpu.memory_space<vmem>>, vector<1x8x128xf32>,
    } else {
    }
    %13 = arith.extui %9 : i1 to i32
    %c0_i32_6 = arith.constant 0 : i32
    %14 = arith.cmpi ne, %13, %c0_i32_6 : i32
    scf.if %14 {
      %c64_i32 = arith.constant 64 : i32
      %15 = arith.muli %8, %c64_i32 : i32
      %16 = tpu.iota {dimensions = array<i32: 0>} : vector<64x128xi32>
      %17 = vector.broadcast %15 : i32 to vector<64x128xi32>
      %18 = arith.addi %17, %16 : vector<64x128xi32>
      %cst = arith.constant 0.000000e+00 : f32
      %19 = vector.broadcast %cst : f32 to vector<64x128xf32>
      %20 = arith.cmpf ogt, %3, %19 : vector<64x128xf32>
      %c64_i32_7 = arith.constant 64 : i32
      %21 = vector.broadcast %c64_i32_7 : i32 to vector<64x128xi32>
      %22 = arith.cmpi slt, %18, %21 : vector<64x128xi32>
      %23 = arith.andi %20, %22 : vector<64x128xi1>
      %cst_8 = arith.constant 0.000000e+00 : f32
      %24 = vector.broadcast %cst_8 : f32 to vector<64x128xf32>
      %25 = arith.select %23, %6, %24 : vector<64x128xi1>, vector<64x128xf32>
      %cst_9 = arith.constant 1.000000e+00 : f32
      %cst_10 = arith.constant 0.000000e+00 : f32
      %26 = vector.broadcast %cst_9 : f32 to vector<64x128xf32>
      %27 = vector.broadcast %cst_10 : f32 to vector<64x128xf32>
      %28 = arith.select %23, %26, %27 : vector<64x128xi1>, vector<64x128xf32>
      %c0_11 = arith.constant 0 : index
      %c0_12 = arith.constant 0 : index
      %c0_13 = arith.constant 0 : index
      %29 = vector.load %arg4[%c0_11, %c0_12, %c0_13] : memref<1x8x128xf32, #tpu.memory_space<vmem>>, vector<1x8x128xf32>
      %30 = vector.shape_cast %25 : vector<64x128xf32> to vector<8x8x128xf32>
      %cst_14 = arith.constant dense<0.000000e+00> : vector<8x128xf32>
      %31 = vector.multi_reduction <add>, %30, %cst_14 [0] : vector<8x8x128xf32> to vector<8x128xf32>
      %32 = vector.shape_cast %31 : vector<8x128xf32> to vector<1x8x128xf32>
      %33 = arith.addf %29, %32 : vector<1x8x128xf32>
      %c0_15 = arith.constant 0 : index
      %c0_16 = arith.constant 0 : index
      %c0_17 = arith.constant 0 : index
      %34 = vector.load %arg4[%c0_15, %c0_16, %c0_17] : memref<1x8x128xf32, #tpu.memory_space<vmem>>, vector<1x8x128xf32>
      tpu.vector_store %arg4[%c0_15, %c0_16, %c0_17], %33 {strides = array<i32>} : memref<1x8x128xf32, #tpu.memory_space<vmem>>, vector<1x8x128xf32>,
      %c0_18 = arith.constant 0 : index
      %c0_19 = arith.constant 0 : index
      %c0_20 = arith.constant 0 : index
      %35 = vector.load %arg5[%c0_18, %c0_19, %c0_20] : memref<1x8x128xf32, #tpu.memory_space<vmem>>, vector<1x8x128xf32>
      %36 = vector.shape_cast %28 : vector<64x128xf32> to vector<8x8x128xf32>
      %cst_21 = arith.constant dense<0.000000e+00> : vector<8x128xf32>
      %37 = vector.multi_reduction <add>, %36, %cst_21 [0] : vector<8x8x128xf32> to vector<8x128xf32>
      %38 = vector.shape_cast %37 : vector<8x128xf32> to vector<1x8x128xf32>
      %39 = arith.addf %35, %38 : vector<1x8x128xf32>
      %c0_22 = arith.constant 0 : index
      %c0_23 = arith.constant 0 : index
      %c0_24 = arith.constant 0 : index
      %40 = vector.load %arg5[%c0_22, %c0_23, %c0_24] : memref<1x8x128xf32, #tpu.memory_space<vmem>>, vector<1x8x128xf32>
      tpu.vector_store %arg5[%c0_22, %c0_23, %c0_24], %39 {strides = array<i32>} : memref<1x8x128xf32, #tpu.memory_space<vmem>>, vector<1x8x128xf32>,
    } else {
    }
    return
  }
  func.func @transform_0(%arg0: i32, %arg1: i32) -> (i32, i32) {
    %c1_i32 = arith.constant 1 : i32
    %0 = arith.muli %arg0, %c1_i32 : i32
    %1 = arith.addi %0, %arg1 : i32
    %c0_i32 = arith.constant 0 : i32
    %2 = arith.minsi %1, %c0_i32 : i32
    %c0_i32_0 = arith.constant 0 : i32
    %c0_i32_1 = arith.constant 0 : i32
    return %2, %c0_i32_0 : i32, i32
  }
  func.func @transform_1(%arg0: i32, %arg1: i32) -> (i32, i32) {
    %c1_i32 = arith.constant 1 : i32
    %0 = arith.muli %arg0, %c1_i32 : i32
    %1 = arith.addi %0, %arg1 : i32
    %c0_i32 = arith.constant 0 : i32
    %2 = arith.minsi %1, %c0_i32 : i32
    %c0_i32_0 = arith.constant 0 : i32
    %c0_i32_1 = arith.constant 0 : i32
    return %2, %c0_i32_0 : i32, i32
  }
  func.func @transform_2(%arg0: i32, %arg1: i32) -> (i32, i32, i32) {
    %c0_i32 = arith.constant 0 : i32
    %c0_i32_0 = arith.constant 0 : i32
    %c0_i32_1 = arith.constant 0 : i32
    return %arg0, %c0_i32, %c0_i32_0 : i32, i32, i32
  }
  func.func @transform_3(%arg0: i32, %arg1: i32) -> (i32, i32, i32) {
    %c0_i32 = arith.constant 0 : i32
    %c0_i32_0 = arith.constant 0 : i32
    %c0_i32_1 = arith.constant 0 : i32
    return %arg0, %c0_i32, %c0_i32_0 : i32, i32, i32
  }
}

</mosaic_0001>

<llo_original>
// kernel: tpu_custom_call.1
$region0: #{tpu_custom_call.1}
  #allocation0 [shape = 'u32[]', space=smem, size = 0x4, offset = 0x4, fixed_abs, tag = 'smem constant byte address 0x4 - core index']
  #allocation1 [shape = 'u32[144,128]{1,0:T(1,128)}', space=vmem, size = 0x12000, scoped, tag = 'internal scratch']
  %s0 = inlined_call_operand.hbm [shape: f32[64,128], index: 0, kind: input, shape index: {}]
  %s1 = inlined_call_operand.hbm [shape: f32[64,128], index: 1, kind: input, shape index: {}]
  %s2 = inlined_call_operand.hbm [shape: f32[1,8,128], index: 2, kind: output, shape index: {0}]
  %s3 = inlined_call_operand.hbm [shape: f32[1,8,128], index: 3, kind: output, shape index: {1}]
  %4 = xla_tuple %s2, %s3
  %s5 = sld [smem:[#allocation0]]
  $region46: #{tpu_custom_call.1} parent=0
    _
  %s7 = ssub.s32 1, %s5
  %s8 = scalar_select 0, %s7, %s5
  $region1: #{tpu_custom_call.1} parent=0
    #allocation2 [shape = 'u8[32768]{0}', space=vmem, size = 0x8000, scoped, tag = 'input window, operand 0, single buffered']
    #allocation3 [shape = 's32[1]{0}', space=sflag, size = 0x4, scoped, tag = 'scoped memory for tpu_custom_call.1']
    #allocation4 [shape = 's32[1]{0}', space=sflag, size = 0x4, scoped, tag = 'scoped memory for tpu_custom_call.1']
    #allocation5 [shape = 'u8[32768]{0}', space=vmem, size = 0x8000, scoped, tag = 'input window, operand 1, single buffered']
    #allocation6 [shape = 's32[1]{0}', space=sflag, size = 0x4, scoped, tag = 'scoped memory for tpu_custom_call.1']
    #allocation7 [shape = 'u8[4096]{0}', space=vmem, size = 0x1000, scoped, tag = 'output window, operand 0, single buffered']
    #allocation8 [shape = 'u8[4096]{0}', space=vmem, size = 0x1000, scoped, tag = 'output window, operand 1, single buffered']
    #allocation9 [shape = 's32[1]{0}', space=sflag, size = 0x4, scoped, tag = 'scoped memory for tpu_custom_call.1']
    %9 = vsyncpa [#allocation3], 0
    %10 = vsyncpa [#allocation6], 0
    %11 = vsyncpa [#allocation4], 0
    %12 = vsyncpa [#allocation9], 0
    // Predicated region
    $region2: #{tpu_custom_call.1} parent=1 // pred_check
      _
    $region3: #{tpu_custom_call.1} parent=1 // pred_check_branch
      %14 = sbr.rel (0) target = $region5
    $region4: #{tpu_custom_call.1} parent=1 // pred_region
      %s15 = sadd.s32 0, 0
      %p16 = scmp.lt.s32.totalorder %s15, 0
      %s17 = scalar_select %p16, %s15, 0
      %s18 = smul.u32 8, %s17
      %s20 = ssub.s32 1024, 1024
      %21 = vsyncadd [#allocation3], %s20
      %s22 = smul.addr %s18, 128
      %s23 = scalar_lea.hbm %s0, %s22
      %s24 = sshll.u32 [#allocation2], 4
      %s25 = int_to_ptr.vmem [resolvable:$true] %s24
      %30 = dma.hbm_to_vmem [thread:$0]  %s23, 1024, %s25, [#allocation3], 128, 128, 8
    $region5: #{tpu_custom_call.1} parent=1 // pred_fallthru
      _
    // Predicated region
    $region6: #{tpu_custom_call.1} parent=1 // pred_check
      _
    $region7: #{tpu_custom_call.1} parent=1 // pred_check_branch
      %32 = sbr.rel (0) target = $region9
    $region8: #{tpu_custom_call.1} parent=1 // pred_region
      %s33 = sadd.s32 0, 0
      %p34 = scmp.lt.s32.totalorder %s33, 0
      %s35 = scalar_select %p34, %s33, 0
      %s36 = smul.u32 8, %s35
      %s38 = ssub.s32 1024, 1024
      %39 = vsyncadd [#allocation6], %s38
      %s40 = smul.addr %s36, 128
      %s41 = scalar_lea.hbm %s1, %s40
      %s42 = sshll.u32 [#allocation5], 4
      %s43 = int_to_ptr.vmem [resolvable:$true] %s42
      %48 = dma.hbm_to_vmem [thread:$0]  %s41, 1024, %s43, [#allocation6], 128, 128, 8
    $region9: #{tpu_custom_call.1} parent=1 // pred_fallthru
      _
    // Predicated region
    $region10: #{tpu_custom_call.1} parent=1 // pred_check
      _
    $region11: #{tpu_custom_call.1} parent=1 // pred_check_branch
      %50 = sbr.rel (0) target = $region13
    $region12: #{tpu_custom_call.1} parent=1 // pred_region
      %51 = dma.done [#allocation3], 1024
    $region13: #{tpu_custom_call.1} parent=1 // pred_fallthru
      _
    // Predicated region
    $region14: #{tpu_custom_call.1} parent=1 // pred_check
      _
    $region15: #{tpu_custom_call.1} parent=1 // pred_check_branch
      %53 = sbr.rel (0) target = $region17
    $region16: #{tpu_custom_call.1} parent=1 // pred_region
      %54 = dma.done [#allocation6], 1024
    $region17: #{tpu_custom_call.1} parent=1 // pred_fallthru
      _
    %s55 = sadd.s32 0, 0
    %p56 = scmp.lt.s32.totalorder %s55, 0
    %s57 = scalar_select %p56, %s55, 0
    %s58 = smul.u32 8, %s57
    %s59 = sadd.s32 0, 0
    %p60 = scmp.lt.s32.totalorder %s59, 0
    %s61 = scalar_select %p60, %s59, 0
    %s62 = smul.u32 8, %s61
    %p63 = scmp.eq.s32.totalorder 0, 0
    // Predicated region
    $region18: #{tpu_custom_call.1} parent=1 // pred_check
      %p64 = pneg %p63
    $region19: #{tpu_custom_call.1} parent=1 // pred_check_branch
      %66 = sbr.rel (%p64) target = $region21
    $region20: #{tpu_custom_call.1} parent=1 // pred_region
      %67 = vst [vmem:[#allocation7] sm:$0xff] 0.0
      %68 = vst [vmem:[#allocation8] sm:$0xff] 0.0
    $region21: #{tpu_custom_call.1} parent=1 // pred_fallthru
      _
    %v69 = vld [vmem:[#allocation5] sm:$0xff]
    %v70 = vld [vmem:[#allocation5 + $0x8] sm:$0xff]
    %v71 = vld [vmem:[#allocation5 + $0x10] sm:$0xff]
    %v72 = vld [vmem:[#allocation5 + $0x18] sm:$0xff]
    %v73 = vld [vmem:[#allocation5 + $0x20] sm:$0xff]
    %v74 = vld [vmem:[#allocation5 + $0x28] sm:$0xff]
    %v75 = vld [vmem:[#allocation5 + $0x30] sm:$0xff]
    %v76 = vld [vmem:[#allocation5 + $0x38] sm:$0xff]
    %v77 = vld [vmem:[#allocation2] sm:$0xff]
    %v78 = vld [vmem:[#allocation2 + $0x8] sm:$0xff]
    %v79 = vld [vmem:[#allocation2 + $0x10] sm:$0xff]
    %v80 = vld [vmem:[#allocation2 + $0x18] sm:$0xff]
    %v81 = vld [vmem:[#allocation2 + $0x20] sm:$0xff]
    %v82 = vld [vmem:[#allocation2 + $0x28] sm:$0xff]
    %v83 = vld [vmem:[#allocation2 + $0x30] sm:$0xff]
    %v84 = vld [vmem:[#allocation2 + $0x38] sm:$0xff]
    %v85 = vsub.f32 %v69, %v77
    %v86 = vsub.f32 %v70, %v78
    %v87 = vsub.f32 %v71, %v79
    %v88 = vsub.f32 %v72, %v80
    %v89 = vsub.f32 %v73, %v81
    %v90 = vsub.f32 %v74, %v82
    %v91 = vsub.f32 %v75, %v83
    %v92 = vsub.f32 %v76, %v84
    %v93 = vand.u32 2147483647, %v85
    %v94 = vand.u32 2147483647, %v86
    %v95 = vand.u32 2147483647, %v87
    %v96 = vand.u32 2147483647, %v88
    %v97 = vand.u32 2147483647, %v89
    %v98 = vand.u32 2147483647, %v90
    %v99 = vand.u32 2147483647, %v91
    %v100 = vand.u32 2147483647, %v92
    %s101 = sadd.s32 0, 0
    %p102 = scmp.ge.s32.totalorder %s101, 0
    %p103 = scmp.lt.s32.totalorder %s101, 0
    // Predicated region
    $region22: #{tpu_custom_call.1} parent=1 // pred_check
      %p104 = pneg %p103
    $region23: #{tpu_custom_call.1} parent=1 // pred_check_branch
      %106 = sbr.rel (%p104) target = $region25
    $region24: #{tpu_custom_call.1} parent=1 // pred_region
      %vm107 = vcmp.gt.f32.partialorder %v69, 0.0
      %vm108 = vcmp.gt.f32.partialorder %v70, 0.0
      %vm109 = vcmp.gt.f32.partialorder %v71, 0.0
      %vm110 = vcmp.gt.f32.partialorder %v72, 0.0
      %vm111 = vcmp.gt.f32.partialorder %v73, 0.0
      %vm112 = vcmp.gt.f32.partialorder %v74, 0.0
      %vm113 = vcmp.gt.f32.partialorder %v75, 0.0
      %vm114 = vcmp.gt.f32.partialorder %v76, 0.0
      %v115 = vsel %vm107, %v93, 0.0
      %v116 = vsel %vm108, %v94, 0.0
      %v117 = vsel %vm109, %v95, 0.0
      %v118 = vsel %vm110, %v96, 0.0
      %v119 = vsel %vm111, %v97, 0.0
      %v120 = vsel %vm112, %v98, 0.0
      %v121 = vsel %vm113, %v99, 0.0
      %v122 = vsel %vm114, %v100, 0.0
      %v123 = vsel %vm107, 1.0, 0.0
      %v124 = vsel %vm108, 1.0, 0.0
      %v125 = vsel %vm109, 1.0, 0.0
      %v126 = vsel %vm110, 1.0, 0.0
      %v127 = vsel %vm111, 1.0, 0.0
      %v128 = vsel %vm112, 1.0, 0.0
      %v129 = vsel %vm113, 1.0, 0.0
      %v130 = vsel %vm114, 1.0, 0.0
      %v131 = vld [vmem:[#allocation7] sm:$0xff]
      %v132 = vadd.f32 %v115, %v116
      %v133 = vadd.f32 %v132, %v117
      %v134 = vadd.f32 %v133, %v118
      %v135 = vadd.f32 %v134, %v119
      %v136 = vadd.f32 %v135, %v120
      %v137 = vadd.f32 %v136, %v121
      %v138 = vadd.f32 %v137, %v122
      %v139 = vadd.f32 %v131, %v138
      %140 = vst [vmem:[#allocation7] sm:$0xff] %v139
      %v141 = vld [vmem:[#allocation8] sm:$0xff]
      %v142 = vadd.f32 %v123, %v124
      %v143 = vadd.f32 %v142, %v125
      %v144 = vadd.f32 %v143, %v126
      %v145 = vadd.f32 %v144, %v127
      %v146 = vadd.f32 %v145, %v128
      %v147 = vadd.f32 %v146, %v129
      %v148 = vadd.f32 %v147, %v130
      %v149 = vadd.f32 %v141, %v148
      %150 = vst [vmem:[#allocation8] sm:$0xff] %v149
    $region25: #{tpu_custom_call.1} parent=1 // pred_fallthru
      _
    // Predicated region
    $region26: #{tpu_custom_call.1} parent=1 // pred_check
      %p151 = pneg %p102
    $region27: #{tpu_custom_call.1} parent=1 // pred_check_branch
      %153 = sbr.rel (%p151) target = $region29
    $region28: #{tpu_custom_call.1} parent=1 // pred_region
      %s154 = smul.u32 %s101, 64
      %v155 = vlaneseq
      %v156 = vshrl.u32 %v155, 7
      %v157 = vadd.s32 %v156, 8
      %v158 = vadd.s32 %v156, 16
      %v159 = vadd.s32 %v156, 24
      %v160 = vadd.s32 %v156, 32
      %v161 = vadd.s32 %v156, 40
      %v162 = vadd.s32 %v156, 48
      %v163 = vadd.s32 %v156, 56
      %v164 = vstv %s154
      %v165 = vadd.s32 %v164, %v156
      %v166 = vadd.s32 %v164, %v157
      %v167 = vadd.s32 %v164, %v158
      %v168 = vadd.s32 %v164, %v159
      %v169 = vadd.s32 %v164, %v160
      %v170 = vadd.s32 %v164, %v161
      %v171 = vadd.s32 %v164, %v162
      %v172 = vadd.s32 %v164, %v163
      %vm173 = vcmp.gt.f32.partialorder %v69, 0.0
      %vm174 = vcmp.gt.f32.partialorder %v70, 0.0
      %vm175 = vcmp.gt.f32.partialorder %v71, 0.0
      %vm176 = vcmp.gt.f32.partialorder %v72, 0.0
      %vm177 = vcmp.gt.f32.partialorder %v73, 0.0
      %vm178 = vcmp.gt.f32.partialorder %v74, 0.0
      %vm179 = vcmp.gt.f32.partialorder %v75, 0.0
      %vm180 = vcmp.gt.f32.partialorder %v76, 0.0
      %vm181 = vcmp.lt.s32.totalorder %v165, 64
      %vm182 = vcmp.lt.s32.totalorder %v166, 64
      %vm183 = vcmp.lt.s32.totalorder %v167, 64
      %vm184 = vcmp.lt.s32.totalorder %v168, 64
      %vm185 = vcmp.lt.s32.totalorder %v169, 64
      %vm186 = vcmp.lt.s32.totalorder %v170, 64
      %vm187 = vcmp.lt.s32.totalorder %v171, 64
      %vm188 = vcmp.lt.s32.totalorder %v172, 64
      %vm189 = vmand %vm173, %vm181
      %vm190 = vmand %vm174, %vm182
      %vm191 = vmand %vm175, %vm183
      %vm192 = vmand %vm176, %vm184
      %vm193 = vmand %vm177, %vm185
      %vm194 = vmand %vm178, %vm186
      %vm195 = vmand %vm179, %vm187
      %vm196 = vmand %vm180, %vm188
      %v197 = vsel %vm189, %v93, 0.0
      %v198 = vsel %vm190, %v94, 0.0
      %v199 = vsel %vm191, %v95, 0.0
      %v200 = vsel %vm192, %v96, 0.0
      %v201 = vsel %vm193, %v97, 0.0
      %v202 = vsel %vm194, %v98, 0.0
      %v203 = vsel %vm195, %v99, 0.0
      %v204 = vsel %vm196, %v100, 0.0
      %v205 = vsel %vm189, 1.0, 0.0
      %v206 = vsel %vm190, 1.0, 0.0
      %v207 = vsel %vm191, 1.0, 0.0
      %v208 = vsel %vm192, 1.0, 0.0
      %v209 = vsel %vm193, 1.0, 0.0
      %v210 = vsel %vm194, 1.0, 0.0
      %v211 = vsel %vm195, 1.0, 0.0
      %v212 = vsel %vm196, 1.0, 0.0
      %v213 = vld [vmem:[#allocation7] sm:$0xff]
      %v214 = vadd.f32 %v197, %v198
      %v215 = vadd.f32 %v214, %v199
      %v216 = vadd.f32 %v215, %v200
      %v217 = vadd.f32 %v216, %v201
      %v218 = vadd.f32 %v217, %v202
      %v219 = vadd.f32 %v218, %v203
      %v220 = vadd.f32 %v219, %v204
      %v221 = vadd.f32 %v213, %v220
      %222 = vst [vmem:[#allocation7] sm:$0xff] %v221
      %v223 = vld [vmem:[#allocation8] sm:$0xff]
      %v224 = vadd.f32 %v205, %v206
      %v225 = vadd.f32 %v224, %v207
      %v226 = vadd.f32 %v225, %v208
      %v227 = vadd.f32 %v226, %v209
      %v228 = vadd.f32 %v227, %v210
      %v229 = vadd.f32 %v228, %v211
      %v230 = vadd.f32 %v229, %v212
      %v231 = vadd.f32 %v223, %v230
      %232 = vst [vmem:[#allocation8] sm:$0xff] %v231
    $region29: #{tpu_custom_call.1} parent=1 // pred_fallthru
      _
    // Predicated region
    $region30: #{tpu_custom_call.1} parent=1 // pred_check
      _
    $region31: #{tpu_custom_call.1} parent=1 // pred_check_branch
      %234 = sbr.rel (0) target = $region33
    $region32: #{tpu_custom_call.1} parent=1 // pred_region
      %s236 = ssub.s32 128, 128
      %237 = vsyncadd [#allocation4], %s236
      %s239 = sshll.u32 [#allocation7], 4
      %s240 = int_to_ptr.vmem [resolvable:$true] %s239
      %242 = dma.vmem_to_hbm [thread:$0]  %s240, 128, %s2, [#allocation4]
    $region33: #{tpu_custom_call.1} parent=1 // pred_fallthru
      _
    // Predicated region
    $region34: #{tpu_custom_call.1} parent=1 // pred_check
      _
    $region35: #{tpu_custom_call.1} parent=1 // pred_check_branch
      %244 = sbr.rel (0) target = $region37
    $region36: #{tpu_custom_call.1} parent=1 // pred_region
      %s246 = ssub.s32 128, 128
      %247 = vsyncadd [#allocation9], %s246
      %s249 = sshll.u32 [#allocation8], 4
      %s250 = int_to_ptr.vmem [resolvable:$true] %s249
      %252 = dma.vmem_to_hbm [thread:$0]  %s250, 128, %s3, [#allocation9]
    $region37: #{tpu_custom_call.1} parent=1 // pred_fallthru
      _
    // Predicated region
    $region38: #{tpu_custom_call.1} parent=1 // pred_check
      _
    $region39: #{tpu_custom_call.1} parent=1 // pred_check_branch
      %254 = sbr.rel (0) target = $region41
    $region40: #{tpu_custom_call.1} parent=1 // pred_region
      %255 = dma.done [#allocation4], 128
    $region41: #{tpu_custom_call.1} parent=1 // pred_fallthru
      _
    // Predicated region
    $region42: #{tpu_custom_call.1} parent=1 // pred_check
      _
    $region43: #{tpu_custom_call.1} parent=1 // pred_check_branch
      %257 = sbr.rel (0) target = $region45
    $region44: #{tpu_custom_call.1} parent=1 // pred_region
      %258 = dma.done [#allocation9], 128
    $region45: #{tpu_custom_call.1} parent=1 // pred_fallthru
      _
    %259 = vsyncpa [#allocation3], 1
    %260 = vsyncpa [#allocation6], 1
    %261 = vsyncpa [#allocation4], 1
    %262 = vsyncpa [#allocation9], 1

</llo_original>
